<compile_context>
chip_gen: v7x
topology: tpu7x:2x2x1
jax: 0.10.0
libtpu: 0.0.40
codegen_flags: <defaults>
</compile_context>

<pallas_src>
import numpy as np
import jax
import jax.numpy as jnp
from jax import lax
from jax.experimental import pallas as pl
from jax.experimental.pallas import tpu as pltpu


def make_sinusoidal_pe(max_len, emb_dim):
    """Exact replica of the PyTorch module's __init__ pe construction (base 1000)."""
    pos = np.expand_dims(np.arange(max_len), 1).astype(np.float64)
    pe = pos / np.power(1000, 2 * np.expand_dims(np.arange(emb_dim), 0) / emb_dim)
    pe[:, 0::2] = np.sin(pe[:, 0::2])
    pe[:, 1::2] = np.cos(pe[:, 1::2])
    return jnp.asarray(pe, dtype=jnp.float32)  # (max_len, emb_dim)


def _pick_seq_tile(max_len, cap):
    """Largest divisor of max_len <= cap, preferring multiples of 8 (sublane)."""
    cap = int(max(1, min(max_len, cap)))
    best_any, best_m8 = 1, 0
    for d in range(1, cap + 1):
        if max_len % d == 0:
            best_any = d
            if d % 8 == 0:
                best_m8 = d
    return best_m8 if best_m8 else best_any


def _pick_chunk(tile_s):
    for c in (8, 4, 2):
        if tile_s % c == 0:
            return c
    return 1


def _make_vmem_table_kernel(tile_s, chunk):
    """Fast path: whole table resident in VMEM; gather = dynamic row indexing."""
    n_chunks = tile_s // chunk

    def kernel(ids_ref, pe_ref, table_ref, out_ref):
        # ids_ref:   (B, max_len)           int32  SMEM (scalar prefetch)
        # pe_ref:    (tile_s, emb_dim_p)    f32    VMEM (reused across inner b axis)
        # table_ref: (n_vocab, emb_dim_p)   f32    VMEM (constant block -> fetched once)
        # out_ref:   (1, tile_s, emb_dim_p) f32    VMEM output block
        t = pl.program_id(0)
        b = pl.program_id(1)
        seq_base = t * tile_s

        def body(c, carry):
            base_row = c * chunk
            for jj in range(chunk):  # short static unroll (LLO-visible)
                r = base_row + jj
                tok = ids_ref[b, seq_base + r]
                out_ref[0, pl.ds(r, 1), :] = (
                    table_ref[pl.ds(tok, 1), :] + pe_ref[pl.ds(r, 1), :]
                )
            return carry

        lax.fori_loop(0, n_chunks, body, 0)

    return kernel


def _make_hbm_table_kernel(tile_s, chunk):
    """Fallback: table stays in HBM; rows gathered by a double-buffered ring of chunked DMAs."""
    n_chunks = tile_s // chunk

    def kernel(ids_ref, pe_ref, table_hbm, out_ref, row_buf, sem):
        # table_hbm: (n_vocab, emb_dim_p) f32  HBM (raw ref, manual DMA gather)
        # row_buf:   (tile_s, emb_dim_p)  f32  VMEM gather scratch
        # sem:       (2, chunk)                DMA semaphore ring
        t = pl.program_id(0)
        b = pl.program_id(1)
        seq_base = t * tile_s

        def row_copy(row, tok, slot, jj):
            # Single descriptor builder used for BOTH start and wait so the dst
            # shape can never diverge between the two (review concern); wait
            # only uses sem + dst byte count, so tok=0 is fine there.
            return pltpu.make_async_copy(
                table_hbm.at[pl.ds(tok, 1), :],
                row_buf.at[pl.ds(row, 1), :],
                sem.at[slot, jj],
            )

        def start_chunk(c):
            base_row = c * chunk
            slot = c % 2
            for jj in range(chunk):
                tok = ids_ref[b, seq_base + base_row + jj]
                row_copy(base_row + jj, tok, slot, jj).start()

        def wait_chunk(c):
            base_row = c * chunk
            slot = c % 2
            for jj in range(chunk):
                row_copy(base_row + jj, 0, slot, jj).wait()

        # Prime the first chunk of gathers.
        start_chunk(0)

        def body(c, carry):
            # Keep the next chunk's DMAs in flight while we wait on / consume
            # the current one (overlap gather latency with the add + store).
            @pl.when(c + 1 < n_chunks)
            def _():
                start_chunk(c + 1)

            wait_chunk(c)

            base_row = pl.multiple_of(c * chunk, chunk)
            rows = row_buf[pl.ds(base_row, chunk), :]
            out_ref[0, pl.ds(base_row, chunk), :] = (
                rows + pe_ref[pl.ds(base_row, chunk), :]
            )
            return carry

        lax.fori_loop(0, n_chunks, body, 0)

    return kernel


def position_embedding(x_ids, table, pe, *, force_hbm_table=False):
    """x_ids: [B, max_len] int, table: [n_vocab, emb_dim] f32, pe: [max_len, emb_dim] f32."""
    B, max_len = x_ids.shape
    n_vocab, emb_dim = table.shape
    assert pe.shape == (max_len, emb_dim)

    # ---- lane-pad emb_dim to a multiple of 128 (unmasked stores, >=512 B rows) ----
    emb_dim_p = ((emb_dim + 127) // 128) * 128
    if emb_dim_p != emb_dim:
        table_p = jnp.pad(table, ((0, 0), (0, emb_dim_p - emb_dim)))
        pe_p = jnp.pad(pe, ((0, 0), (0, emb_dim_p - emb_dim)))
    else:
        table_p, pe_p = table, pe

    # Clamp ids once in the wrapper (keeps the kernel's scalar slots free).
    # Note: out-of-range ids are clamped instead of raising like nn.Embedding.
    ids = jnp.clip(x_ids.astype(jnp.int32), 0, n_vocab - 1)

    # ---- per-generation VMEM budget ----
    try:
        vmem_cap = int(pltpu.get_tpu_info().vmem_capacity_bytes)
    except Exception:
        vmem_cap = 64 << 20  # conservative fallback: v7x per-core VMEM
    budget = (vmem_cap * 3) // 8  # ~24 MiB on v7x, ~48 MiB on v5e/v6e

    table_bytes = n_vocab * emb_dim_p * 4
    use_vmem_table = (not force_hbm_table) and (2 * table_bytes <= budget // 2)

    row_bytes = emb_dim_p * 4
    bufs_per_row = 4 if use_vmem_table else 5  # 2x pe + 2x out (+ row_buf)
    tile_budget = budget - (2 * table_bytes if use_vmem_table else 0)
    tile_s = _pick_seq_tile(max_len, max(8, tile_budget // (bufs_per_row * row_bytes)))
    n_seq_tiles = max_len // tile_s
    chunk = _pick_chunk(tile_s)

    block_bytes = tile_s * row_bytes
    need = 4 * block_bytes  # pe (2x buffered) + out (2x buffered)
    if use_vmem_table:
        need += 2 * table_bytes
        in_specs = [
            pl.BlockSpec((tile_s, emb_dim_p), lambda t, b, ids: (t, 0)),    # pe tile
            pl.BlockSpec((n_vocab, emb_dim_p), lambda t, b, ids: (0, 0)),   # whole table, fetched once
        ]
        scratch_shapes = []
        kernel = _make_vmem_table_kernel(tile_s, chunk)
    else:
        need += block_bytes  # row_buf scratch
        in_specs = [
            pl.BlockSpec((tile_s, emb_dim_p), lambda t, b, ids: (t, 0)),    # pe tile
            pl.BlockSpec(memory_space=pl.ANY),                              # table stays in HBM
        ]
        scratch_shapes = [
            pltpu.VMEM((tile_s, emb_dim_p), jnp.float32),
            pltpu.SemaphoreType.DMA((2, chunk)),
        ]
        kernel = _make_hbm_table_kernel(tile_s, chunk)

    vmem_limit = int(min((vmem_cap * 7) // 8, max(4 << 20, (need * 5) // 4 + (1 << 20))))

    # Grid is (seq tiles, batch): the pe block index is constant across the
    # inner batch axis, so it is not re-fetched for every b.
    grid_spec = pltpu.PrefetchScalarGridSpec(
        num_scalar_prefetch=1,  # x_ids -> SMEM
        grid=(n_seq_tiles, B),
        in_specs=in_specs,
        out_specs=pl.BlockSpec((1, tile_s, emb_dim_p), lambda t, b, ids: (b, t, 0)),
        scratch_shapes=scratch_shapes,
    )
    # TODO(synk): for very long sequences / large batches, stage per-tile id
    # slices into SMEM instead of scalar-prefetching the whole (B, max_len) matrix.

    out_p = pl.pallas_call(
        kernel,
        out_shape=jax.ShapeDtypeStruct((B, max_len, emb_dim_p), jnp.float32),
        grid_spec=grid_spec,
        compiler_params=pltpu.CompilerParams(
            dimension_semantics=("parallel", "parallel"),
            vmem_limit_bytes=vmem_limit,
        ),
    )(ids, pe_p, table_p)

    return out_p[..., :emb_dim] if emb_dim_p != emb_dim else out_p


if __name__ == "__main__":
    # Small shapes consistent with the module's forward semantics
    # (pe broadcast requires seq_len == max_len).
    B, max_len, emb_dim, n_vocab = 2, 8, 32, 64

    key = jax.random.PRNGKey(0)
    k_tab, k_ids = jax.random.split(key)

    # nn.Embedding weight: normal(0, 0.1), deterministic here.
    table = jax.random.normal(k_tab, (n_vocab, emb_dim), dtype=jnp.float32) * 0.1
    pe = make_sinusoidal_pe(max_len, emb_dim)
    x_ids = jax.random.randint(k_ids, (B, max_len), 0, n_vocab, dtype=jnp.int32)

    # Pure-JAX reference: embedding lookup + broadcast-add of pe.
    ref = table[x_ids] + pe[None, :, :]

    # Fast path (table resident in VMEM) -- the one selected for these shapes.
    out = jax.block_until_ready(position_embedding(x_ids, table, pe))
    np.testing.assert_allclose(np.asarray(out), np.asarray(ref), rtol=1e-5, atol=1e-5)

    # Large-vocab fallback path (table in HBM, ring-DMA gather), forced here so
    # both code paths are exercised and checked.
    out_hbm = jax.block_until_ready(
        position_embedding(x_ids, table, pe, force_hbm_table=True)
    )
    np.testing.assert_allclose(np.asarray(out_hbm), np.asarray(ref), rtol=1e-5, atol=1e-5)

    print("KERNEL_OK")
</pallas_src>

<mosaic_0001>
module attributes {stable_mosaic.version = 11 : i64} {
  func.func @kernel(%arg0: i32, %arg1: i32, %arg2: memref<2x8xi32, #tpu.memory_space<smem>>, %arg3: memref<8x128xf32, #tpu.memory_space<vmem>>, %arg4: memref<64x128xf32, #tpu.memory_space<vmem>>, %arg5: memref<1x8x128xf32, #tpu.memory_space<vmem>>) attributes {dimension_semantics = [#tpu.dimension_semantics<parallel>, #tpu.dimension_semantics<parallel>], iteration_bounds = array<i64: 1, 2>, scalar_prefetch = 1 : i64, scratch_operands = 0 : i64, tpu.core_type = #tpu.core_type<tc>, window_params = [{transform_indices = @transform_0, window_bounds = array<i64: 8, 128>}, {pipeline_mode = #tpu.pipeline_mode<synchronous>, transform_indices = @transform_1, window_bounds = array<i64: 64, 128>}, {transform_indices = @transform_2, window_bounds = array<i64: 1, 8, 128>}]} {
    %c8_i32 = arith.constant 8 : i32
    %0 = arith.muli %arg0, %c8_i32 : i32
    %c0_i32 = arith.constant 0 : i32
    %c8_i32_0 = arith.constant 8 : i32
    %1 = arith.muli %c0_i32, %c8_i32_0 : i32
    %c0_i32_1 = arith.constant 0 : i32
    %2 = arith.addi %1, %c0_i32_1 : i32
    %3 = arith.addi %0, %2 : i32
    %4 = arith.index_cast %arg1 : i32 to index
    %5 = arith.index_cast %3 : i32 to index
    %6 = memref.load %arg2[%4, %5] : memref<2x8xi32, #tpu.memory_space<smem>>
    %7 = arith.index_cast %6 : i32 to index
    %c0 = arith.constant 0 : index
    %8 = vector.load %arg4[%7, %c0] : memref<64x128xf32, #tpu.memory_space<vmem>>, vector<1x128xf32>
    %9 = arith.index_cast %2 : i32 to index
    %c0_2 = arith.constant 0 : index
    %10 = vector.load %arg3[%9, %c0_2] : memref<8x128xf32, #tpu.memory_space<vmem>>, vector<1x128xf32>
    %11 = arith.addf %8, %10 : vector<1x128xf32>
    %c0_3 = arith.constant 0 : index
    %12 = arith.index_cast %2 : i32 to index
    %c0_4 = arith.constant 0 : index
    %13 = vector.load %arg5[%c0_3, %12, %c0_4] : memref<1x8x128xf32, #tpu.memory_space<vmem>>, vector<1x1x128xf32>
    %14 = vector.shape_cast %13 : vector<1x1x128xf32> to vector<1x128xf32>
    %15 = vector.shape_cast %11 : vector<1x128xf32> to vector<1x1x128xf32>
    tpu.vector_store %arg5[%c0_3, %12, %c0_4], %15 {strides = array<i32>} : memref<1x8x128xf32, #tpu.memory_space<vmem>>, vector<1x1x128xf32>,
    %c1_i32 = arith.constant 1 : i32
    %16 = arith.addi %1, %c1_i32 : i32
    %17 = arith.addi %0, %16 : i32
    %18 = arith.index_cast %arg1 : i32 to index
    %19 = arith.index_cast %17 : i32 to index
    %20 = memref.load %arg2[%18, %19] : memref<2x8xi32, #tpu.memory_space<smem>>
    %21 = arith.index_cast %20 : i32 to index
    %c0_5 = arith.constant 0 : index
    %22 = vector.load %arg4[%21, %c0_5] : memref<64x128xf32, #tpu.memory_space<vmem>>, vector<1x128xf32>
    %23 = arith.index_cast %16 : i32 to index
    %c0_6 = arith.constant 0 : index
    %24 = vector.load %arg3[%23, %c0_6] : memref<8x128xf32, #tpu.memory_space<vmem>>, vector<1x128xf32>
    %25 = arith.addf %22, %24 : vector<1x128xf32>
    %c0_7 = arith.constant 0 : index
    %26 = arith.index_cast %16 : i32 to index
    %c0_8 = arith.constant 0 : index
    %27 = vector.load %arg5[%c0_7, %26, %c0_8] : memref<1x8x128xf32, #tpu.memory_space<vmem>>, vector<1x1x128xf32>
    %28 = vector.shape_cast %27 : vector<1x1x128xf32> to vector<1x128xf32>
    %29 = vector.shape_cast %25 : vector<1x128xf32> to vector<1x1x128xf32>
    tpu.vector_store %arg5[%c0_7, %26, %c0_8], %29 {strides = array<i32>} : memref<1x8x128xf32, #tpu.memory_space<vmem>>, vector<1x1x128xf32>,
    %c2_i32 = arith.constant 2 : i32
    %30 = arith.addi %1, %c2_i32 : i32
    %31 = arith.addi %0, %30 : i32
    %32 = arith.index_cast %arg1 : i32 to index
    %33 = arith.index_cast %31 : i32 to index
    %34 = memref.load %arg2[%32, %33] : memref<2x8xi32, #tpu.memory_space<smem>>
    %35 = arith.index_cast %34 : i32 to index
    %c0_9 = arith.constant 0 : index
    %36 = vector.load %arg4[%35, %c0_9] : memref<64x128xf32, #tpu.memory_space<vmem>>, vector<1x128xf32>
    %37 = arith.index_cast %30 : i32 to index
    %c0_10 = arith.constant 0 : index
    %38 = vector.load %arg3[%37, %c0_10] : memref<8x128xf32, #tpu.memory_space<vmem>>, vector<1x128xf32>
    %39 = arith.addf %36, %38 : vector<1x128xf32>
    %c0_11 = arith.constant 0 : index
    %40 = arith.index_cast %30 : i32 to index
    %c0_12 = arith.constant 0 : index
    %41 = vector.load %arg5[%c0_11, %40, %c0_12] : memref<1x8x128xf32, #tpu.memory_space<vmem>>, vector<1x1x128xf32>
    %42 = vector.shape_cast %41 : vector<1x1x128xf32> to vector<1x128xf32>
    %43 = vector.shape_cast %39 : vector<1x128xf32> to vector<1x1x128xf32>
    tpu.vector_store %arg5[%c0_11, %40, %c0_12], %43 {strides = array<i32>} : memref<1x8x128xf32, #tpu.memory_space<vmem>>, vector<1x1x128xf32>,
    %c3_i32 = arith.constant 3 : i32
    %44 = arith.addi %1, %c3_i32 : i32
    %45 = arith.addi %0, %44 : i32
    %46 = arith.index_cast %arg1 : i32 to index
    %47 = arith.index_cast %45 : i32 to index
    %48 = memref.load %arg2[%46, %47] : memref<2x8xi32, #tpu.memory_space<smem>>
    %49 = arith.index_cast %48 : i32 to index
    %c0_13 = arith.constant 0 : index
    %50 = vector.load %arg4[%49, %c0_13] : memref<64x128xf32, #tpu.memory_space<vmem>>, vector<1x128xf32>
    %51 = arith.index_cast %44 : i32 to index
    %c0_14 = arith.constant 0 : index
    %52 = vector.load %arg3[%51, %c0_14] : memref<8x128xf32, #tpu.memory_space<vmem>>, vector<1x128xf32>
    %53 = arith.addf %50, %52 : vector<1x128xf32>
    %c0_15 = arith.constant 0 : index
    %54 = arith.index_cast %44 : i32 to index
    %c0_16 = arith.constant 0 : index
    %55 = vector.load %arg5[%c0_15, %54, %c0_16] : memref<1x8x128xf32, #tpu.memory_space<vmem>>, vector<1x1x128xf32>
    %56 = vector.shape_cast %55 : vector<1x1x128xf32> to vector<1x128xf32>
    %57 = vector.shape_cast %53 : vector<1x128xf32> to vector<1x1x128xf32>
    tpu.vector_store %arg5[%c0_15, %54, %c0_16], %57 {strides = array<i32>} : memref<1x8x128xf32, #tpu.memory_space<vmem>>, vector<1x1x128xf32>,
    %c4_i32 = arith.constant 4 : i32
    %58 = arith.addi %1, %c4_i32 : i32
    %59 = arith.addi %0, %58 : i32
    %60 = arith.index_cast %arg1 : i32 to index
    %61 = arith.index_cast %59 : i32 to index
    %62 = memref.load %arg2[%60, %61] : memref<2x8xi32, #tpu.memory_space<smem>>
    %63 = arith.index_cast %62 : i32 to index
    %c0_17 = arith.constant 0 : index
    %64 = vector.load %arg4[%63, %c0_17] : memref<64x128xf32, #tpu.memory_space<vmem>>, vector<1x128xf32>
    %65 = arith.index_cast %58 : i32 to index
    %c0_18 = arith.constant 0 : index
    %66 = vector.load %arg3[%65, %c0_18] : memref<8x128xf32, #tpu.memory_space<vmem>>, vector<1x128xf32>
    %67 = arith.addf %64, %66 : vector<1x128xf32>
    %c0_19 = arith.constant 0 : index
    %68 = arith.index_cast %58 : i32 to index
    %c0_20 = arith.constant 0 : index
    %69 = vector.load %arg5[%c0_19, %68, %c0_20] : memref<1x8x128xf32, #tpu.memory_space<vmem>>, vector<1x1x128xf32>
    %70 = vector.shape_cast %69 : vector<1x1x128xf32> to vector<1x128xf32>
    %71 = vector.shape_cast %67 : vector<1x128xf32> to vector<1x1x128xf32>
    tpu.vector_store %arg5[%c0_19, %68, %c0_20], %71 {strides = array<i32>} : memref<1x8x128xf32, #tpu.memory_space<vmem>>, vector<1x1x128xf32>,
    %c5_i32 = arith.constant 5 : i32
    %72 = arith.addi %1, %c5_i32 : i32
    %73 = arith.addi %0, %72 : i32
    %74 = arith.index_cast %arg1 : i32 to index
    %75 = arith.index_cast %73 : i32 to index
    %76 = memref.load %arg2[%74, %75] : memref<2x8xi32, #tpu.memory_space<smem>>
    %77 = arith.index_cast %76 : i32 to index
    %c0_21 = arith.constant 0 : index
    %78 = vector.load %arg4[%77, %c0_21] : memref<64x128xf32, #tpu.memory_space<vmem>>, vector<1x128xf32>
    %79 = arith.index_cast %72 : i32 to index
    %c0_22 = arith.constant 0 : index
    %80 = vector.load %arg3[%79, %c0_22] : memref<8x128xf32, #tpu.memory_space<vmem>>, vector<1x128xf32>
    %81 = arith.addf %78, %80 : vector<1x128xf32>
    %c0_23 = arith.constant 0 : index
    %82 = arith.index_cast %72 : i32 to index
    %c0_24 = arith.constant 0 : index
    %83 = vector.load %arg5[%c0_23, %82, %c0_24] : memref<1x8x128xf32, #tpu.memory_space<vmem>>, vector<1x1x128xf32>
    %84 = vector.shape_cast %83 : vector<1x1x128xf32> to vector<1x128xf32>
    %85 = vector.shape_cast %81 : vector<1x128xf32> to vector<1x1x128xf32>
    tpu.vector_store %arg5[%c0_23, %82, %c0_24], %85 {strides = array<i32>} : memref<1x8x128xf32, #tpu.memory_space<vmem>>, vector<1x1x128xf32>,
    %c6_i32 = arith.constant 6 : i32
    %86 = arith.addi %1, %c6_i32 : i32
    %87 = arith.addi %0, %86 : i32
    %88 = arith.index_cast %arg1 : i32 to index
    %89 = arith.index_cast %87 : i32 to index
    %90 = memref.load %arg2[%88, %89] : memref<2x8xi32, #tpu.memory_space<smem>>
    %91 = arith.index_cast %90 : i32 to index
    %c0_25 = arith.constant 0 : index
    %92 = vector.load %arg4[%91, %c0_25] : memref<64x128xf32, #tpu.memory_space<vmem>>, vector<1x128xf32>
    %93 = arith.index_cast %86 : i32 to index
    %c0_26 = arith.constant 0 : index
    %94 = vector.load %arg3[%93, %c0_26] : memref<8x128xf32, #tpu.memory_space<vmem>>, vector<1x128xf32>
    %95 = arith.addf %92, %94 : vector<1x128xf32>
    %c0_27 = arith.constant 0 : index
    %96 = arith.index_cast %86 : i32 to index
    %c0_28 = arith.constant 0 : index
    %97 = vector.load %arg5[%c0_27, %96, %c0_28] : memref<1x8x128xf32, #tpu.memory_space<vmem>>, vector<1x1x128xf32>
    %98 = vector.shape_cast %97 : vector<1x1x128xf32> to vector<1x128xf32>
    %99 = vector.shape_cast %95 : vector<1x128xf32> to vector<1x1x128xf32>
    tpu.vector_store %arg5[%c0_27, %96, %c0_28], %99 {strides = array<i32>} : memref<1x8x128xf32, #tpu.memory_space<vmem>>, vector<1x1x128xf32>,
    %c7_i32 = arith.constant 7 : i32
    %100 = arith.addi %1, %c7_i32 : i32
    %101 = arith.addi %0, %100 : i32
    %102 = arith.index_cast %arg1 : i32 to index
    %103 = arith.index_cast %101 : i32 to index
    %104 = memref.load %arg2[%102, %103] : memref<2x8xi32, #tpu.memory_space<smem>>
    %105 = arith.index_cast %104 : i32 to index
    %c0_29 = arith.constant 0 : index
    %106 = vector.load %arg4[%105, %c0_29] : memref<64x128xf32, #tpu.memory_space<vmem>>, vector<1x128xf32>
    %107 = arith.index_cast %100 : i32 to index
    %c0_30 = arith.constant 0 : index
    %108 = vector.load %arg3[%107, %c0_30] : memref<8x128xf32, #tpu.memory_space<vmem>>, vector<1x128xf32>
    %109 = arith.addf %106, %108 : vector<1x128xf32>
    %c0_31 = arith.constant 0 : index
    %110 = arith.index_cast %100 : i32 to index
    %c0_32 = arith.constant 0 : index
    %111 = vector.load %arg5[%c0_31, %110, %c0_32] : memref<1x8x128xf32, #tpu.memory_space<vmem>>, vector<1x1x128xf32>
    %112 = vector.shape_cast %111 : vector<1x1x128xf32> to vector<1x128xf32>
    %113 = vector.shape_cast %109 : vector<1x128xf32> to vector<1x1x128xf32>
    tpu.vector_store %arg5[%c0_31, %110, %c0_32], %113 {strides = array<i32>} : memref<1x8x128xf32, #tpu.memory_space<vmem>>, vector<1x1x128xf32>,
    %c1_i32_33 = arith.constant 1 : i32
    return
  }
  func.func @transform_0(%arg0: i32, %arg1: i32, %arg2: memref<2x8xi32, #tpu.memory_space<smem>>) -> (i32, i32) {
    %c0_i32 = arith.constant 0 : i32
    %c0_i32_0 = arith.constant 0 : i32
    return %arg0, %c0_i32 : i32, i32
  }
  func.func @transform_1(%arg0: i32, %arg1: i32, %arg2: memref<2x8xi32, #tpu.memory_space<smem>>) -> (i32, i32) {
    %c0_i32 = arith.constant 0 : i32
    %c0_i32_0 = arith.constant 0 : i32
    %c0_i32_1 = arith.constant 0 : i32
    return %c0_i32, %c0_i32_0 : i32, i32
  }
  func.func @transform_2(%arg0: i32, %arg1: i32, %arg2: memref<2x8xi32, #tpu.memory_space<smem>>) -> (i32, i32, i32) {
    %c0_i32 = arith.constant 0 : i32
    %c0_i32_0 = arith.constant 0 : i32
    return %arg1, %arg0, %c0_i32 : i32, i32, i32
  }
}

</mosaic_0001>

<llo_original>
// kernel: tpu_custom_call.1
$region0: #{tpu_custom_call.1}
  #allocation0 [shape = 'u32[]', space=smem, size = 0x4, offset = 0x4, fixed_abs, tag = 'smem constant byte address 0x4 - core index']
  #allocation1 [shape = 'u32[144,128]{1,0:T(1,128)}', space=vmem, size = 0x12000, scoped, tag = 'internal scratch']
  #allocation2 [shape = 's32[1]{0}', space=sflag, size = 0x4, scoped, tag = 'scoped memory for tpu_custom_call.1']
  #allocation3 [shape = 'u8[1024]{0}', space=smem, size = 0x400, scoped, tag = 'prefetched SMEM operand 0']
  %s0 = inlined_call_operand.hbm [shape: s32[2,8], index: 0, kind: input, shape index: {}]
  %s1 = inlined_call_operand.hbm [shape: f32[8,128], index: 1, kind: input, shape index: {}]
  %s2 = inlined_call_operand.hbm [shape: f32[64,128], index: 2, kind: input, shape index: {}]
  %s3 = inlined_call_operand.hbm [shape: f32[2,8,128], index: 3, kind: output, shape index: {}]
  %s4 = sld [smem:[#allocation0]]
  $region49: #{tpu_custom_call.1} parent=0
    _
  %s6 = ssub.s32 1, %s4
  %s7 = scalar_select 0, %s6, %s4
  %9 = dma.hbm_to_smem %s0, 32, [#allocation3], [#allocation2]
  %10 = dma.done [#allocation2], 32
  %11 = sfence
  $region1: #{tpu_custom_call.1} parent=0
    #allocation4 [shape = 'u8[4096]{0}', space=vmem, size = 0x1000, scoped, tag = 'input window, operand 1, single buffered']
    #allocation5 [shape = 's32[2]{0}', space=sflag, size = 0x8, scoped, tag = 'scoped memory for tpu_custom_call.1']
    #allocation6 [shape = 's32[2]{0}', space=sflag, size = 0x8, scoped, tag = 'scoped memory for tpu_custom_call.1']
    #allocation7 [shape = 'u8[32768]{0}', space=vmem, size = 0x8000, scoped, tag = 'input window, operand 2, single buffered']
    #allocation8 [shape = 's32[1]{0}', space=sflag, size = 0x4, scoped, tag = 'scoped memory for tpu_custom_call.1']
    #allocation9 [shape = 'u8[8192]{0}', space=vmem, size = 0x2000, scoped, tag = 'output window, operand 0']
    %12 = vsyncpa [#allocation5], 0
    %13 = vsyncpa [#allocation8], 0
    %14 = vsyncpa [#allocation6], 0
    %s15 = scalar_lea.sflag [#allocation6], 1
    %16 = vsyncpa %s15, 0
    loop: start=0, step=1, limit=4
    $region2: #{tpu_custom_call.1} parent=1 // loop_pre_header
      _
    $region3: #{tpu_custom_call.1} parent=1 // loop_header
      %s18 = sphi 0, %s22
      %p19 = scmp.ge.s32.totalorder %s18, 4
      %s25 = sphi 0, %s37
      %s26 = sphi 0, %s33
      %s27 = sphi 0, %s25
      %s28 = sphi 0, %s26
      %s29 = sphi 0, %s27
      %s30 = sphi 0, %s28
      %s40 = sphi 0, %s42
      %s43 = sphi 0, %s40
      %s44 = sphi 0, %s43
      %s60 = sphi 0, %s44
      %s64 = sphi 0, %s64
      %s66 = sphi 0, %s64
      %s67 = sphi 0, %s66
      %s81 = sphi 0, %s67
      %s89 = sphi 0, %s91
      %s92 = sphi 0, %s89
      %s93 = sphi 0, %s92
      %s109 = sphi 0, %s93
    $region4: #{tpu_custom_call.1} parent=1 // loop_header_branch
      %21 = sbr.rel (%p19) target = $region8
    $region5: #{tpu_custom_call.1} parent=1 // loop_body
      %s23 = ssub.s32 %s18, 1
      %s24 = ssub.s32 %s18, 2
      %s31 = sadd.s32 1, %s26
      %p32 = scmp.ge.s32.totalorder %s31, 2
      %s33 = scalar_select %p32, 0, %s31
      %s34 = sadd.s32 1, %s25
      %s35 = scalar_select %p32, %s34, %s25
      %p36 = scmp.ge.s32.totalorder %s35, 1
      %s37 = scalar_select %p36, 0, %s35
      %s38 = ssub.s32 %s25, %s37
      %p39 = scmp.eq.s32.totalorder %s38, 0
      %s41 = sadd.s32 %s40, 1
      %s42 = scalar_select %p39, %s40, %s41
      %p45 = pneg %p39
      %p46 = scmp.eq.s32.totalorder %s18, 1
      %p47 = por %p45, %p46
      %p48 = scmp.ne.s32.totalorder %s40, %s43
      %p49 = scmp.eq.s32.totalorder %s18, 0
      %p50 = por %p48, %p49
      %p51 = scmp.ne.s32.totalorder %s40, %s43
      %p52 = scmp.eq.s32.totalorder %s23, 1
      %p53 = por %p51, %p52
      %p54 = scmp.ne.s32.totalorder %s43, %s44
      %p55 = scmp.eq.s32.totalorder %s23, 0
      %p56 = por %p54, %p55
      %p57 = scmp.ne.s32.totalorder %s43, %s44
      %p58 = scmp.eq.s32.totalorder %s24, 1
      %p59 = por %p57, %p58
      %p61 = scmp.ne.s32.totalorder %s44, %s60
      %p62 = scmp.eq.s32.totalorder %s24, 0
      %p63 = por %p61, %p62
      %s65 = sadd.s32 %s64, 1
      %p68 = scmp.eq.s32.totalorder %s18, 1
      %p69 = scmp.ne.s32.totalorder %s64, %s66
      %p70 = scmp.eq.s32.totalorder %s18, 0
      %p71 = por %p69, %p70
      %p72 = scmp.ne.s32.totalorder %s64, %s66
      %p73 = scmp.eq.s32.totalorder %s23, 1
      %p74 = por %p72, %p73
      %p75 = scmp.ne.s32.totalorder %s66, %s67
      %p76 = scmp.eq.s32.totalorder %s23, 0
      %p77 = por %p75, %p76
      %p78 = scmp.ne.s32.totalorder %s66, %s67
      %p79 = scmp.eq.s32.totalorder %s24, 1
      %p80 = por %p78, %p79
      %p82 = scmp.ne.s32.totalorder %s67, %s81
      %p83 = scmp.eq.s32.totalorder %s24, 0
      %p84 = por %p82, %p83
      %s85 = ssub.s32 %s26, %s33
      %s86 = ssub.s32 %s25, %s37
      %s87 = sor.u32 %s85, %s86
      %p88 = scmp.eq.s32.totalorder %s87, 0
      %s90 = sadd.s32 %s89, 1
      %s91 = scalar_select %p88, %s89, %s90
      %p94 = pneg %p88
      %p95 = scmp.eq.s32.totalorder %s18, 1
      %p96 = por %p94, %p95
      %p97 = scmp.ne.s32.totalorder %s89, %s92
      %p98 = scmp.eq.s32.totalorder %s18, 0
      %p99 = por %p97, %p98
      %p100 = scmp.ne.s32.totalorder %s89, %s92
      %p101 = scmp.eq.s32.totalorder %s23, 1
      %p102 = por %p100, %p101
      %p103 = scmp.ne.s32.totalorder %s92, %s93
      %p104 = scmp.eq.s32.totalorder %s23, 0
      %p105 = por %p103, %p104
      %p106 = scmp.ne.s32.totalorder %s92, %s93
      %p107 = scmp.eq.s32.totalorder %s24, 1
      %p108 = por %p106, %p107
      %p110 = scmp.ne.s32.totalorder %s93, %s109
      %p111 = scmp.eq.s32.totalorder %s24, 0
      %p112 = por %p110, %p111
      %p113 = scmp.le.s32.totalorder 1, %s18
      %p114 = scmp.lt.s32.totalorder %s18, 3
      %p115 = pnand %p113, %p114
      %p116 = pneg %p115
      // Predicated region
      $region9: #{tpu_custom_call.1} parent=5 // pred_check
        _
      $region10: #{tpu_custom_call.1} parent=5 // pred_check_branch
        %118 = sbr.rel (%p115) target = $region12
      $region11: #{tpu_custom_call.1} parent=5 // pred_region
        %s119 = ssub.s32 %s18, 1
        // Predicated region
        $region13: #{tpu_custom_call.1} parent=11 // pred_check
          %p120 = pneg %p56
        $region14: #{tpu_custom_call.1} parent=11 // pred_check_branch
          %122 = sbr.rel (%p120) target = $region16
        $region15: #{tpu_custom_call.1} parent=11 // pred_region
          %s124 = ssub.s32 128, 128
          %125 = vsyncadd [#allocation5], %s124
          %s126 = smul.addr %s27, 128
          %s127 = scalar_lea.hbm %s1, %s126
          %s129 = sshll.u32 [#allocation4], 4
          %s130 = int_to_ptr.vmem [resolvable:$true] %s129
          %132 = dma.hbm_to_vmem [thread:$0]  %s127, 128, %s130, [#allocation5]
        $region16: #{tpu_custom_call.1} parent=11 // pred_fallthru
          _
        // Predicated region
        $region17: #{tpu_custom_call.1} parent=11 // pred_check
          %p133 = pneg %p77
        $region18: #{tpu_custom_call.1} parent=11 // pred_check_branch
          %135 = sbr.rel (%p133) target = $region20
        $region19: #{tpu_custom_call.1} parent=11 // pred_region
          %s137 = ssub.s32 1024, 1024
          %138 = vsyncadd [#allocation8], %s137
          %s139 = sshll.u32 [#allocation7], 4
          %s140 = int_to_ptr.vmem [resolvable:$true] %s139
          %145 = dma.hbm_to_vmem [thread:$0]  %s2, 1024, %s140, [#allocation8], 128, 128, 8
        $region20: #{tpu_custom_call.1} parent=11 // pred_fallthru
          _
      $region12: #{tpu_custom_call.1} parent=5 // pred_fallthru
        _
      %p146 = scmp.lt.s32.totalorder %s18, 2
      // Predicated region
      $region21: #{tpu_custom_call.1} parent=5 // pred_check
        %p147 = pneg %p146
      $region22: #{tpu_custom_call.1} parent=5 // pred_check_branch
        %149 = sbr.rel (%p147) target = $region24
      $region23: #{tpu_custom_call.1} parent=5 // pred_region
        _
      $region24: #{tpu_custom_call.1} parent=5 // pred_fallthru
        _
      %p150 = scmp.le.s32.totalorder 1, %s18
      %p151 = scmp.lt.s32.totalorder %s18, 3
      %p152 = pnand %p150, %p151
      %p153 = pneg %p152
      // Predicated region
      $region25: #{tpu_custom_call.1} parent=5 // pred_check
        _
      $region26: #{tpu_custom_call.1} parent=5 // pred_check_branch
        %155 = sbr.rel (%p152) target = $region28
      $region27: #{tpu_custom_call.1} parent=5 // pred_region
        %s156 = ssub.s32 %s18, 1
        // Predicated region
        $region29: #{tpu_custom_call.1} parent=27 // pred_check
          %p157 = pneg %p56
        $region30: #{tpu_custom_call.1} parent=27 // pred_check_branch
          %159 = sbr.rel (%p157) target = $region32
        $region31: #{tpu_custom_call.1} parent=27 // pred_region
          %160 = dma.done [#allocation5], 128
        $region32: #{tpu_custom_call.1} parent=27 // pred_fallthru
          _
        // Predicated region
        $region33: #{tpu_custom_call.1} parent=27 // pred_check
          %p161 = pneg %p77
        $region34: #{tpu_custom_call.1} parent=27 // pred_check_branch
          %163 = sbr.rel (%p161) target = $region36
        $region35: #{tpu_custom_call.1} parent=27 // pred_region
          %164 = dma.done [#allocation8], 1024
        $region36: #{tpu_custom_call.1} parent=27 // pred_fallthru
          _
        %p165 = pneg %p56
        %p166 = pneg %p53
        %p167 = pneg %p77
        %p168 = pneg %p74
        %p169 = pneg %p105
        %p170 = pneg %p102
        %s171 = sand.u32 %s92, 1
        %s172 = scalar_lea.sflag [#allocation6], %s171
        %s173 = sand.u32 %s92, 1
        %s174 = smul.addr %s173, 8
        %s175 = scalar_lea.vmem [#allocation9], %s174
        %s176 = smul.u32 %s27, 8
        %s177 = sshra.s32 %s176, 7
        %s178 = sand.u32 %s176, 127
        %s179 = sadd.s32 %s177, %s28
        %s180 = smul.u32 %s179, 128
        %s181 = sshra.s32 %s176, 7
        %s182 = sand.u32 %s176, 127
        %s183 = sadd.s32 %s180, %s182
        %s184 = sld [smem:[#allocation3 + %s183]]
        %s185 = scalar_lea.vmem [#allocation7], %s184
        %v186 = vld [vmem:[%s185] sm:$0x1]
        %v187 = vld [vmem:[#allocation4] sm:$0x1]
        %v188 = vadd.f32 %v186, %v187
        %189 = vst [vmem:[%s175] sm:$0x1] %v188
        %s190 = sadd.s32 %s176, 1
        %s191 = sshra.s32 %s190, 7
        %s192 = sand.u32 %s190, 127
        %s193 = sadd.s32 %s191, %s28
        %s194 = smul.u32 %s193, 128
        %s195 = sshra.s32 %s190, 7
        %s196 = sand.u32 %s190, 127
        %s197 = sadd.s32 %s194, %s196
        %s198 = sld [smem:[#allocation3 + %s197]]
        %s199 = scalar_lea.vmem [#allocation7], %s198
        %v200 = vld [vmem:[%s199] sm:$0x1]
        %v201 = vld [vmem:[#allocation4 + $0x1] sm:$0x1]
        %v202 = vadd.f32 %v200, %v201
        %203 = vst [vmem:[%s175 + $0x1] sm:$0x1] %v202
        %s204 = sadd.s32 %s176, 2
        %s205 = sshra.s32 %s204, 7
        %s206 = sand.u32 %s204, 127
        %s207 = sadd.s32 %s205, %s28
        %s208 = smul.u32 %s207, 128
        %s209 = sshra.s32 %s204, 7
        %s210 = sand.u32 %s204, 127
        %s211 = sadd.s32 %s208, %s210
        %s212 = sld [smem:[#allocation3 + %s211]]
        %s213 = scalar_lea.vmem [#allocation7], %s212
        %v214 = vld [vmem:[%s213] sm:$0x1]
        %v215 = vld [vmem:[#allocation4 + $0x2] sm:$0x1]
        %v216 = vadd.f32 %v214, %v215
        %217 = vst [vmem:[%s175 + $0x2] sm:$0x1] %v216
        %s218 = sadd.s32 %s176, 3
        %s219 = sshra.s32 %s218, 7
        %s220 = sand.u32 %s218, 127
        %s221 = sadd.s32 %s219, %s28
        %s222 = smul.u32 %s221, 128
        %s223 = sshra.s32 %s218, 7
        %s224 = sand.u32 %s218, 127
        %s225 = sadd.s32 %s222, %s224
        %s226 = sld [smem:[#allocation3 + %s225]]
        %s227 = scalar_lea.vmem [#allocation7], %s226
        %v228 = vld [vmem:[%s227] sm:$0x1]
        %v229 = vld [vmem:[#allocation4 + $0x3] sm:$0x1]
        %v230 = vadd.f32 %v228, %v229
        %231 = vst [vmem:[%s175 + $0x3] sm:$0x1] %v230
        %s232 = sadd.s32 %s176, 4
        %s233 = sshra.s32 %s232, 7
        %s234 = sand.u32 %s232, 127
        %s235 = sadd.s32 %s233, %s28
        %s236 = smul.u32 %s235, 128
        %s237 = sshra.s32 %s232, 7
        %s238 = sand.u32 %s232, 127
        %s239 = sadd.s32 %s236, %s238
        %s240 = sld [smem:[#allocation3 + %s239]]
        %s241 = scalar_lea.vmem [#allocation7], %s240
        %v242 = vld [vmem:[%s241] sm:$0x1]
        %v243 = vld [vmem:[#allocation4 + $0x4] sm:$0x1]
        %v244 = vadd.f32 %v242, %v243
        %245 = vst [vmem:[%s175 + $0x4] sm:$0x1] %v244
        %s246 = sadd.s32 %s176, 5
        %s247 = sshra.s32 %s246, 7
        %s248 = sand.u32 %s246, 127
        %s249 = sadd.s32 %s247, %s28
        %s250 = smul.u32 %s249, 128
        %s251 = sshra.s32 %s246, 7
        %s252 = sand.u32 %s246, 127
        %s253 = sadd.s32 %s250, %s252
        %s254 = sld [smem:[#allocation3 + %s253]]
        %s255 = scalar_lea.vmem [#allocation7], %s254
        %v256 = vld [vmem:[%s255] sm:$0x1]
        %v257 = vld [vmem:[#allocation4 + $0x5] sm:$0x1]
        %v258 = vadd.f32 %v256, %v257
        %259 = vst [vmem:[%s175 + $0x5] sm:$0x1] %v258
        %s260 = sadd.s32 %s176, 6
        %s261 = sshra.s32 %s260, 7
        %s262 = sand.u32 %s260, 127
        %s263 = sadd.s32 %s261, %s28
        %s264 = smul.u32 %s263, 128
        %s265 = sshra.s32 %s260, 7
        %s266 = sand.u32 %s260, 127
        %s267 = sadd.s32 %s264, %s266
        %s268 = sld [smem:[#allocation3 + %s267]]
        %s269 = scalar_lea.vmem [#allocation7], %s268
        %v270 = vld [vmem:[%s269] sm:$0x1]
        %v271 = vld [vmem:[#allocation4 + $0x6] sm:$0x1]
        %v272 = vadd.f32 %v270, %v271
        %273 = vst [vmem:[%s175 + $0x6] sm:$0x1] %v272
        %s274 = sadd.s32 %s176, 7
        %s275 = sshra.s32 %s274, 7
        %s276 = sand.u32 %s274, 127
        %s277 = sadd.s32 %s275, %s28
        %s278 = smul.u32 %s277, 128
        %s279 = sshra.s32 %s274, 7
        %s280 = sand.u32 %s274, 127
        %s281 = sadd.s32 %s278, %s280
        %s282 = sld [smem:[#allocation3 + %s281]]
        %s283 = scalar_lea.vmem [#allocation7], %s282
        %v284 = vld [vmem:[%s283] sm:$0x1]
        %v285 = vld [vmem:[#allocation4 + $0x7] sm:$0x1]
        %v286 = vadd.f32 %v284, %v285
        %287 = vst [vmem:[%s175 + $0x7] sm:$0x1] %v286
        %s288 = sand.u32 %s92, 1
        %s289 = scalar_lea.sflag [#allocation6], %s288
        %s290 = sand.u32 %s92, 1
        %s291 = smul.addr %s290, 8
        %s292 = scalar_lea.vmem [#allocation9], %s291
        // Predicated region
        $region37: #{tpu_custom_call.1} parent=27 // pred_check
          %p293 = pneg %p102
        $region38: #{tpu_custom_call.1} parent=27 // pred_check_branch
          %295 = sbr.rel (%p293) target = $region40
        $region39: #{tpu_custom_call.1} parent=27 // pred_region
          %s297 = ssub.s32 128, 128
          %298 = vsyncadd %s289, %s297
          %s299 = sadd.s32 %s27, %s28
          %s300 = smul.addr %s299, 128
          %s301 = scalar_lea.hbm %s3, %s300
          %s303 = sshll.u32 %s292, 4
          %s304 = int_to_ptr.vmem [resolvable:$true] %s303
          %306 = dma.vmem_to_hbm [thread:$0]  %s304, 128, %s301, %s289
        $region40: #{tpu_custom_call.1} parent=27 // pred_fallthru
          _
      $region28: #{tpu_custom_call.1} parent=5 // pred_fallthru
        _
      %p307 = scmp.le.s32.totalorder 2, %s18
      // Predicated region
      $region41: #{tpu_custom_call.1} parent=5 // pred_check
        %p308 = pneg %p307
      $region42: #{tpu_custom_call.1} parent=5 // pred_check_branch
        %310 = sbr.rel (%p308) target = $region44
      $region43: #{tpu_custom_call.1} parent=5 // pred_region
        %s311 = ssub.s32 %s18, 2
        // Predicated region
        $region45: #{tpu_custom_call.1} parent=43 // pred_check
          %p312 = pneg %p108
        $region46: #{tpu_custom_call.1} parent=43 // pred_check_branch
          %314 = sbr.rel (%p312) target = $region48
        $region47: #{tpu_custom_call.1} parent=43 // pred_region
          %s315 = sand.u32 %s93, 1
          %s316 = scalar_lea.sflag [#allocation6], %s315
          %s317 = sand.u32 %s93, 1
          %s318 = smul.addr %s317, 8
          %s319 = scalar_lea.vmem [#allocation9], %s318
          %320 = dma.done %s316, 128
        $region48: #{tpu_custom_call.1} parent=43 // pred_fallthru
          _
      $region44: #{tpu_custom_call.1} parent=5 // pred_fallthru
        _
    $region6: #{tpu_custom_call.1} parent=1 // loop_footer
      %s22 = sadd.s32 1, %s18
    $region7: #{tpu_custom_call.1} parent=1 // loop_footer_branch
      %17 = sbr.rel target = $region3
    $region8: #{tpu_custom_call.1} parent=1 // loop_exit
      _
    %321 = vsyncpa [#allocation5], 1
    %s322 = scalar_lea.sflag [#allocation5], 1
    %323 = vsyncpa %s322, 1
    %324 = vsyncpa [#allocation8], 1
    %325 = vsyncpa [#allocation6], 1
    %s326 = scalar_lea.sflag [#allocation6], 1
    %327 = vsyncpa %s326, 1

</llo_original>
